<compile_context>
chip_gen: v6e
topology: v6e:2x2x1
jax: 0.10.0
libtpu: 0.0.40
codegen_flags: <defaults>
</compile_context>

<pallas_src>
import math
from functools import partial

import jax
import jax.numpy as jnp
from jax.experimental import pallas as pl
from jax.experimental.pallas import tpu as pltpu


ACT_DTYPE = jnp.bfloat16      # inter-kernel activation storage dtype (HBM)
MXU_DTYPE = jnp.bfloat16      # MXU ingest dtype (accumulation stays f32)
WEIGHT_DTYPE = jnp.bfloat16   # storage dtype for big matmul weights
NEG_INF = -1e9


# ----------------------------------------------------------------------------
# helpers
# ----------------------------------------------------------------------------
def _round_up(x, m):
    return ((x + m - 1) // m) * m


def _tile(dim, target, align):
    """Largest tile <= target, multiple of `align`, dividing dim; else full dim."""
    if dim <= target:
        return dim
    t = (target // align) * align
    while t >= align:
        if dim % t == 0:
            return t
        t -= align
    return dim


def _row_tiling(M, target):
    """Row tile (multiple of 8) and padded row count for row-tiled kernels."""
    tm = min(target, _round_up(M, 8))
    return tm, _round_up(M, tm)


def _pad_rows(x, rows):
    pad = rows - x.shape[0]
    if pad == 0:
        return x
    return jnp.pad(x, ((0, pad),) + ((0, 0),) * (x.ndim - 1))


def _gelu_tanh(x):
    # TODO(synk): torch nn.GELU() default is exact erf-GELU; tanh approximation is
    # used in-kernel (erf lowering in Mosaic is not guaranteed on all jax versions).
    c = 0.7978845608028654  # sqrt(2/pi)
    return 0.5 * x * (1.0 + jnp.tanh(c * (x + 0.044715 * x * x * x)))


# ----------------------------------------------------------------------------
# Tiled linear (+ optional fused activation epilogue), bf16 in / bf16 out
# ----------------------------------------------------------------------------
def _linear_kernel(x_ref, w_ref, b_ref, o_ref, acc_ref, *, activation):
    k = pl.program_id(2)

    @pl.when(k == 0)
    def _():
        acc_ref[...] = jnp.zeros_like(acc_ref)

    acc_ref[...] += jnp.dot(
        x_ref[...].astype(MXU_DTYPE),
        w_ref[...].astype(MXU_DTYPE),
        preferred_element_type=jnp.float32,
    )

    @pl.when(k == pl.num_programs(2) - 1)
    def _():
        y = acc_ref[...] + b_ref[...]
        if activation == "gelu":
            y = _gelu_tanh(y)
        o_ref[...] = y.astype(o_ref.dtype)


def linear(x2d, w, b, activation=None, *, out_dtype=ACT_DTYPE,
           tm=256, tn=512, tk=1024):
    """y = act(x @ w + b).  x2d: [M,K], w: [K,N], b: [N] -> [M,N] (out_dtype)."""
    M0, K = x2d.shape
    N = w.shape[1]
    tm, Mp = _row_tiling(M0, tm)
    tn = _tile(N, tn, 128)
    tk = _tile(K, tk, 128)
    x2d = _pad_rows(x2d, Mp)
    grid = (Mp // tm, N // tn, K // tk)
    out = pl.pallas_call(
        partial(_linear_kernel, activation=activation),
        out_shape=jax.ShapeDtypeStruct((Mp, N), out_dtype),
        grid=grid,
        in_specs=[
            pl.BlockSpec((tm, tk), lambda i, j, k: (i, k)),
            pl.BlockSpec((tk, tn), lambda i, j, k: (k, j)),
            pl.BlockSpec((1, tn), lambda i, j, k: (0, j)),
        ],
        out_specs=pl.BlockSpec((tm, tn), lambda i, j, k: (i, j)),
        scratch_shapes=[pltpu.VMEM((tm, tn), jnp.float32)],
        compiler_params=pltpu.CompilerParams(
            dimension_semantics=("parallel", "parallel", "arbitrary")),
    )(x2d, w, b.reshape(1, N).astype(jnp.float32))
    return out[:M0] if Mp != M0 else out


# ----------------------------------------------------------------------------
# Tiled linear with fused bias + residual + LayerNorm epilogue
#   out = LN(res + x @ w + b)          (full N kept resident for the LN reduce)
# ----------------------------------------------------------------------------
def _linear_res_ln_kernel(x_ref, w_ref, b_ref, r_ref, g_ref, bb_ref,
                          o_ref, acc_ref, *, eps):
    k = pl.program_id(1)

    @pl.when(k == 0)
    def _():
        acc_ref[...] = jnp.zeros_like(acc_ref)

    acc_ref[...] += jnp.dot(
        x_ref[...].astype(MXU_DTYPE),
        w_ref[...].astype(MXU_DTYPE),
        preferred_element_type=jnp.float32,
    )

    @pl.when(k == pl.num_programs(1) - 1)
    def _():
        y = acc_ref[...] + b_ref[...] + r_ref[...].astype(jnp.float32)
        mu = jnp.mean(y, axis=-1, keepdims=True)
        var = jnp.mean(jnp.square(y - mu), axis=-1, keepdims=True)
        o_ref[...] = ((y - mu) * jax.lax.rsqrt(var + eps) * g_ref[...]
                      + bb_ref[...]).astype(o_ref.dtype)


def linear_residual_ln(x2d, w, b, res2d, gamma, beta, *, eps=1e-5,
                       out_dtype=ACT_DTYPE, tm=256, tk=1024):
    M0, K = x2d.shape
    N = w.shape[1]
    tm, Mp = _row_tiling(M0, tm)
    tk = _tile(K, tk, 128)
    x2d = _pad_rows(x2d, Mp)
    res2d = _pad_rows(res2d, Mp)
    grid = (Mp // tm, K // tk)
    out = pl.pallas_call(
        partial(_linear_res_ln_kernel, eps=eps),
        out_shape=jax.ShapeDtypeStruct((Mp, N), out_dtype),
        grid=grid,
        in_specs=[
            pl.BlockSpec((tm, tk), lambda i, k: (i, k)),
            pl.BlockSpec((tk, N), lambda i, k: (k, 0)),
            pl.BlockSpec((1, N), lambda i, k: (0, 0)),
            pl.BlockSpec((tm, N), lambda i, k: (i, 0)),
            pl.BlockSpec((1, N), lambda i, k: (0, 0)),
            pl.BlockSpec((1, N), lambda i, k: (0, 0)),
        ],
        out_specs=pl.BlockSpec((tm, N), lambda i, k: (i, 0)),
        scratch_shapes=[pltpu.VMEM((tm, N), jnp.float32)],
        compiler_params=pltpu.CompilerParams(
            dimension_semantics=("parallel", "arbitrary")),
    )(x2d, w, b.reshape(1, N).astype(jnp.float32), res2d,
      gamma.reshape(1, N).astype(jnp.float32),
      beta.reshape(1, N).astype(jnp.float32))
    return out[:M0] if Mp != M0 else out


# ----------------------------------------------------------------------------
# Plain LayerNorm (row tiled), bf16 in / bf16 out, f32 math
# ----------------------------------------------------------------------------
def _ln_kernel(x_ref, g_ref, b_ref, o_ref, *, eps):
    x = x_ref[...].astype(jnp.float32)
    mu = jnp.mean(x, axis=-1, keepdims=True)
    var = jnp.mean(jnp.square(x - mu), axis=-1, keepdims=True)
    o_ref[...] = ((x - mu) * jax.lax.rsqrt(var + eps) * g_ref[...]
                  + b_ref[...]).astype(o_ref.dtype)


def layernorm(x2d, gamma, beta, *, eps=1e-5, out_dtype=ACT_DTYPE, tm=256):
    M0, D = x2d.shape
    tm, Mp = _row_tiling(M0, tm)
    x2d = _pad_rows(x2d, Mp)
    out = pl.pallas_call(
        partial(_ln_kernel, eps=eps),
        out_shape=jax.ShapeDtypeStruct((Mp, D), out_dtype),
        grid=(Mp // tm,),
        in_specs=[
            pl.BlockSpec((tm, D), lambda i: (i, 0)),
            pl.BlockSpec((1, D), lambda i: (0, 0)),
            pl.BlockSpec((1, D), lambda i: (0, 0)),
        ],
        out_specs=pl.BlockSpec((tm, D), lambda i: (i, 0)),
        compiler_params=pltpu.CompilerParams(dimension_semantics=("parallel",)),
    )(x2d, gamma.reshape(1, D).astype(jnp.float32),
      beta.reshape(1, D).astype(jnp.float32))
    return out[:M0] if Mp != M0 else out


# ----------------------------------------------------------------------------
# Weighted 4-way fusion + residual + LayerNorm in one kernel
#   out = LN(res + w0*S + w1*O + w2*A + w3*P)
# S and O are read directly from the [M, 4E] cross-attention output via column
# index_maps (no XLA slices).
# ----------------------------------------------------------------------------
def _fuse4_ln_kernel(wf_ref, sc_ref, oc_ref, ac_ref, pc_ref, res_ref,
                     g_ref, b_ref, out_ref, *, eps):
    y = (wf_ref[0] * sc_ref[...].astype(jnp.float32)
         + wf_ref[1] * oc_ref[...].astype(jnp.float32)
         + wf_ref[2] * ac_ref[...].astype(jnp.float32)
         + wf_ref[3] * pc_ref[...].astype(jnp.float32)
         + res_ref[...].astype(jnp.float32))
    mu = jnp.mean(y, axis=-1, keepdims=True)
    var = jnp.mean(jnp.square(y - mu), axis=-1, keepdims=True)
    out_ref[...] = ((y - mu) * jax.lax.rsqrt(var + eps) * g_ref[...]
                    + b_ref[...]).astype(out_ref.dtype)


def fuse4_add_layernorm(fuse_w, ctx4_2d, a2d, p2d, res2d, gamma, beta, *,
                        embed_dim, eps=1e-5, out_dtype=ACT_DTYPE, tm=256):
    M0 = res2d.shape[0]
    D = embed_dim
    tm, Mp = _row_tiling(M0, tm)
    ctx4_2d = _pad_rows(ctx4_2d, Mp)
    a2d = _pad_rows(a2d, Mp)
    p2d = _pad_rows(p2d, Mp)
    res2d = _pad_rows(res2d, Mp)
    row = pl.BlockSpec((tm, D), lambda i: (i, 0))
    vec = pl.BlockSpec((1, D), lambda i: (0, 0))
    out = pl.pallas_call(
        partial(_fuse4_ln_kernel, eps=eps),
        out_shape=jax.ShapeDtypeStruct((Mp, D), out_dtype),
        grid=(Mp // tm,),
        in_specs=[pl.BlockSpec(memory_space=pltpu.MemorySpace.SMEM),
                  pl.BlockSpec((tm, D), lambda i: (i, 0)),   # S_ctx = column block 0
                  pl.BlockSpec((tm, D), lambda i: (i, 1)),   # O_ctx = column block 1
                  row, row, row, vec, vec],
        out_specs=row,
        compiler_params=pltpu.CompilerParams(dimension_semantics=("parallel",)),
    )(fuse_w.astype(jnp.float32), ctx4_2d, ctx4_2d, a2d, p2d, res2d,
      gamma.reshape(1, D).astype(jnp.float32),
      beta.reshape(1, D).astype(jnp.float32))
    return out[:M0] if Mp != M0 else out


# ----------------------------------------------------------------------------
# Flash attention: grid (B, sections, q-blocks, kv-blocks), online softmax with
# f32 running max / denominator / accumulator in VMEM scratch.  Q/K/V are E-wide
# column blocks of lane-dense [B, L, C*E] arrays; output is [B, Lq, sections*E].
# ----------------------------------------------------------------------------
def _flash_attn_kernel(*refs, num_heads, head_dim, scale, causal, has_bias, tq, tk):
    if has_bias:
        q_ref, k_ref, v_ref, b_ref, o_ref, m_ref, l_ref, acc_ref = refs
    else:
        q_ref, k_ref, v_ref, o_ref, m_ref, l_ref, acc_ref = refs
        b_ref = None

    kv = pl.program_id(3)
    nkv = pl.num_programs(3)

    @pl.when(kv == 0)
    def _():
        m_ref[...] = jnp.full_like(m_ref, -1e30)   # finite: avoids inf-inf NaNs
        l_ref[...] = jnp.zeros_like(l_ref)
        acc_ref[...] = jnp.zeros_like(acc_ref)

    q_start = pl.program_id(2) * tq
    kv_start = kv * tk

    def block_body():
        if has_bias:
            bias = b_ref[0].astype(jnp.float32)                       # [1, tk]
        if causal:
            rows = q_start + jax.lax.broadcasted_iota(jnp.int32, (tq, tk), 0)
            cols = kv_start + jax.lax.broadcasted_iota(jnp.int32, (tq, tk), 1)
            causal_bias = jnp.where(cols <= rows, 0.0, NEG_INF).astype(jnp.float32)

        for h in range(num_heads):                                    # unrolled
            lo = h * head_dim
            qh = q_ref[0, :, lo:lo + head_dim]                        # [tq, Dh]
            kh = k_ref[0, :, lo:lo + head_dim]                        # [tk, Dh]
            vh = v_ref[0, :, lo:lo + head_dim]                        # [tk, Dh]

            s = jax.lax.dot_general(                                  # [tq, tk] f32
                qh.astype(MXU_DTYPE), kh.astype(MXU_DTYPE),
                (((1,), (1,)), ((), ())),
                preferred_element_type=jnp.float32)
            if scale != 1.0:
                s = s * scale
            if has_bias:
                s = s + bias
            if causal:
                s = s + causal_bias

            m_prev = m_ref[h]                                         # [tq, 1]
            m_new = jnp.maximum(m_prev, jnp.max(s, axis=-1, keepdims=True))
            alpha = jnp.exp(m_prev - m_new)
            p = jnp.exp(s - m_new)
            l_ref[h] = alpha * l_ref[h] + jnp.sum(p, axis=-1, keepdims=True)
            acc_ref[h] = alpha * acc_ref[h] + jax.lax.dot_general(
                p.astype(MXU_DTYPE), vh.astype(MXU_DTYPE),
                (((1,), (0,)), ((), ())),
                preferred_element_type=jnp.float32)
            m_ref[h] = m_new

    if causal:
        # skip KV blocks that lie entirely above the causal diagonal
        @pl.when(kv_start <= q_start + tq - 1)
        def _():
            block_body()
    else:
        block_body()

    @pl.when(kv == nkv - 1)
    def _():
        # normalize after PV (Dh-wide multiply instead of Lk-wide) and write the
        # heads at their lane offsets -> full E-wide lane-dense output block.
        for h in range(num_heads):
            lo = h * head_dim
            inv = pl.reciprocal(l_ref[h], approx=True)                # [tq, 1]
            o_ref[0, :, lo:lo + head_dim] = (acc_ref[h] * inv).astype(o_ref.dtype)


def flash_attention(q, k, v, bias=None, *, embed_dim, num_heads,
                    sq=1, q_sec0=0, k_sec=0, v_sec=0,
                    scale=1.0, causal=False, tq=128, tk=512):
    """Multi-head attention, flash-tiled over (q blocks, kv blocks).

    q: [B, Lq, Cq*E]  (column block `q_sec0 + s` is section s's query, s < sq)
    k: [B, Lk, Ck*E]  (column block `k_sec` is K); v likewise with `v_sec`
    bias: optional additive key-padding bias [B, Lk] (f32)
    returns [B, Lq, sq*E] in ACT_DTYPE (heads concatenated lane-dense per section)
    """
    B, Lq, _ = q.shape
    _, Lk, _ = k.shape
    E = embed_dim
    Dh = E // num_heads
    tq = _tile(Lq, tq, 8)     # TODO(synk): ragged Lq/Lk fall back to full-length tiles
    tk = _tile(Lk, tk, 128)
    grid = (B, sq, Lq // tq, Lk // tk)

    in_specs = [
        pl.BlockSpec((1, tq, E), lambda b, s, qi, kv: (b, qi, q_sec0 + s)),
        pl.BlockSpec((1, tk, E), lambda b, s, qi, kv: (b, kv, k_sec)),
        pl.BlockSpec((1, tk, E), lambda b, s, qi, kv: (b, kv, v_sec)),
    ]
    args = [q, k, v]
    if bias is not None:
        in_specs.append(pl.BlockSpec((1, 1, tk), lambda b, s, qi, kv: (b, 0, kv)))
        args.append(bias.reshape(B, 1, Lk).astype(jnp.float32))

    return pl.pallas_call(
        partial(_flash_attn_kernel, num_heads=num_heads, head_dim=Dh,
                scale=scale, causal=causal, has_bias=bias is not None,
                tq=tq, tk=tk),
        out_shape=jax.ShapeDtypeStruct((B, Lq, sq * E), ACT_DTYPE),
        grid=grid,
        in_specs=in_specs,
        out_specs=pl.BlockSpec((1, tq, E), lambda b, s, qi, kv: (b, qi, s)),
        scratch_shapes=[
            pltpu.VMEM((num_heads, tq, 1), jnp.float32),    # running max
            pltpu.VMEM((num_heads, tq, 1), jnp.float32),    # running denom
            pltpu.VMEM((num_heads, tq, Dh), jnp.float32),   # accumulator
        ],
        compiler_params=pltpu.CompilerParams(
            dimension_semantics=("parallel", "parallel", "parallel", "arbitrary")),
    )(*args)


# ----------------------------------------------------------------------------
# Model glue (plain JAX: embedding gathers, free reshapes)
# ----------------------------------------------------------------------------
def decoder_layer_forward(hidden, dec_bias, enc_hidden, enc_bias, p, num_heads):
    B, L, E = hidden.shape
    Lenc = enc_hidden.shape[1]
    M = B * L
    h2 = hidden.reshape(M, E)                                   # bf16 residual stream

    # ---- self attention: fused QKV projection, Q/K/V picked by column index_maps
    qkv = linear(h2, p["self_attn"]["in_proj_w"], p["self_attn"]["in_proj_b"])
    qkv3 = qkv.reshape(B, L, 3 * E)
    # 1/sqrt(Dh) was folded into the Q projection weights -> scale=1.0 here.
    ctx = flash_attention(qkv3, qkv3, qkv3, dec_bias,
                          embed_dim=E, num_heads=num_heads,
                          q_sec0=0, k_sec=1, v_sec=2,
                          scale=1.0, causal=True)               # [B, L, E]
    h2 = linear_residual_ln(ctx.reshape(M, E), p["self_attn"]["out_proj_w"],
                            p["self_attn"]["out_proj_b"], h2,
                            p["self_ln_g"], p["self_ln_b"])

    # ---- multi-query cross attention: fused K/V ([E,2E]) and fused 4xQ ([E,4E])
    enc2 = enc_hidden.reshape(B * Lenc, E)
    kv = linear(enc2, p["kv_w"], p["kv_b"]).reshape(B, Lenc, 2 * E)
    q4 = linear(h2, p["q_w"], p["q_b"]).reshape(B, L, 4 * E)
    # NOTE: reference applies no 1/sqrt(Dh) scaling on the SOAP cross-attention.
    ctx4 = flash_attention(q4, kv, kv, enc_bias,
                           embed_dim=E, num_heads=num_heads,
                           sq=4, q_sec0=0, k_sec=0, v_sec=1,
                           scale=1.0, causal=False)             # [B, L, 4E]

    # ---- inter-section attention (single "head" of width E):
    #      A attends to [S;O], P attends to the un-normalized A_enhanced
    SO = jnp.concatenate([ctx4[:, :, :E], ctx4[:, :, E:2 * E]], axis=1)   # [B, 2L, E]
    A_enh = flash_attention(ctx4, SO, SO, None, embed_dim=E, num_heads=1,
                            q_sec0=2, scale=1.0 / math.sqrt(E))           # [B, L, E]
    A_enh_n = layernorm(A_enh.reshape(M, E), p["ln_A_g"], p["ln_A_b"])
    P_enh = flash_attention(ctx4, A_enh, A_enh, None, embed_dim=E, num_heads=1,
                            q_sec0=3, scale=1.0 / math.sqrt(E))
    P_enh_n = layernorm(P_enh.reshape(M, E), p["ln_P_g"], p["ln_P_b"])

    # ---- weighted fusion + residual + LN (S/O read straight from ctx4 columns)
    h2 = fuse4_add_layernorm(p["fuse_w"], ctx4.reshape(M, 4 * E),
                             A_enh_n, P_enh_n, h2,
                             p["cross_ln_g"], p["cross_ln_b"], embed_dim=E)

    # ---- FFN: fc1 + fused GELU, fc2 + fused residual + LN
    f1 = linear(h2, p["fc1_w"], p["fc1_b"], activation="gelu")
    h2 = linear_residual_ln(f1, p["fc2_w"], p["fc2_b"], h2,
                            p["final_ln_g"], p["final_ln_b"])
    return h2.reshape(B, L, E)


def decoder_forward(decoder_input_ids, decoder_attention_mask,
                    encoder_hidden_states, encoder_attention_mask,
                    params, config):
    B, L = decoder_input_ids.shape
    E = config["d_model"]
    H = config["num_heads"]
    M = B * L

    # token + position embeddings (gathers stay in XLA)
    inputs_embeds = params["embed_tokens"][decoder_input_ids]    # [B, L, E] f32
    if config.get("scale_embedding", False):
        inputs_embeds = inputs_embeds * math.sqrt(E)
    positions = jnp.arange(L, dtype=jnp.int32) + 2
    pos_embeds = params["embed_positions"][positions][None]      # [1, L, E]
    hidden = (inputs_embeds + pos_embeds).astype(ACT_DTYPE).reshape(M, E)
    hidden = layernorm(hidden, params["ln_emb_g"], params["ln_emb_b"]).reshape(B, L, E)

    # decoder 0/1 key-padding mask -> additive bias; causal part is built in-kernel.
    # encoder mask is consumed as-is (module expects an already-additive [B,1,1,Lenc]).
    dec_bias = (1.0 - decoder_attention_mask.astype(jnp.float32)) * NEG_INF   # [B, L]
    enc_bias = encoder_attention_mask.reshape(B, -1).astype(jnp.float32)      # [B, Lenc]

    enc_h = encoder_hidden_states.astype(ACT_DTYPE)
    for lp in params["layers"]:
        hidden = decoder_layer_forward(hidden, dec_bias, enc_h, enc_bias, lp, H)
    return hidden.astype(jnp.float32)


# ----------------------------------------------------------------------------
# Deterministic parameter init (synthetic; no checkpoint loading)
# ----------------------------------------------------------------------------
def init_params(key, config):
    E = config["d_model"]
    F = config["ffn_dim"]
    V = config["vocab"]
    Pmax = config["max_pos"] + 2
    n_layers = config["layers"]
    H = config["num_heads"]
    Dh = E // H

    keys = iter(jax.random.split(key, 16 + n_layers * 32))

    def nrm(shape, std=0.02):
        return std * jax.random.normal(next(keys), shape, jnp.float32)

    def wmat(shape):
        return nrm(shape).astype(WEIGHT_DTYPE)   # bf16 weights, f32 accumulate

    params = {
        "embed_tokens": nrm((V, E)),
        "embed_positions": nrm((Pmax, E)).at[config["pad_token_id"]].set(0.0),
        "ln_emb_g": jnp.ones((E,), jnp.float32),
        "ln_emb_b": jnp.zeros((E,), jnp.float32),
        "layers": [],
    }
    q_scale = 1.0 / math.sqrt(Dh)   # MultiheadAttention scale folded into Q proj
    for _ in range(n_layers):
        in_proj_w = nrm((E, 3 * E))
        in_proj_b = nrm((3 * E,))
        in_proj_w = in_proj_w.at[:, :E].multiply(q_scale)
        in_proj_b = in_proj_b.at[:E].multiply(q_scale)
        lp = {
            "self_attn": {
                "in_proj_w": in_proj_w.astype(WEIGHT_DTYPE),
                "in_proj_b": in_proj_b,
                "out_proj_w": wmat((E, E)),
                "out_proj_b": nrm((E,)),
            },
            "self_ln_g": jnp.ones((E,), jnp.float32),
            "self_ln_b": jnp.zeros((E,), jnp.float32),
            "kv_w": wmat((E, 2 * E)), "kv_b": nrm((2 * E,)),
            "q_w": wmat((E, 4 * E)), "q_b": nrm((4 * E,)),
            "fuse_w": jnp.full((4,), 0.25, jnp.float32),
            "cross_ln_g": jnp.ones((E,), jnp.float32),
            "cross_ln_b": jnp.zeros((E,), jnp.float32),
            "ln_A_g": jnp.ones((E,), jnp.float32),
            "ln_A_b": jnp.zeros((E,), jnp.float32),
            "ln_P_g": jnp.ones((E,), jnp.float32),
            "ln_P_b": jnp.zeros((E,), jnp.float32),
            "fc1_w": wmat((E, F)), "fc1_b": nrm((F,)),
            "fc2_w": wmat((F, E)), "fc2_b": nrm((E,)),
            "final_ln_g": jnp.ones((E,), jnp.float32),
            "final_ln_b": jnp.zeros((E,), jnp.float32),
        }
        params["layers"].append(lp)
    return params


# ----------------------------------------------------------------------------
if __name__ == "__main__":
    config = dict(
        d_model=128, num_heads=4, ffn_dim=256, layers=2,
        vocab=50, max_pos=64, pad_token_id=1, scale_embedding=False,
    )
    B, L, Lenc = 2, 8, 16

    key = jax.random.PRNGKey(0)
    k_ids, k_enc, k_params = jax.random.split(key, 3)

    params = init_params(k_params, config)

    decoder_input_ids = jax.random.randint(k_ids, (B, L), 0, config["vocab"], jnp.int32)
    decoder_attention_mask = jnp.ones((B, L), jnp.float32)
    encoder_hidden_states = jax.random.normal(
        k_enc, (B, Lenc, config["d_model"]), jnp.float32
    )
    # encoder mask prepared as additive [B, 1, 1, Lenc]; pad last 3 tokens of batch 1
    enc_pad = jnp.ones((B, Lenc), jnp.float32).at[1, -3:].set(0.0)
    encoder_attention_mask = ((1.0 - enc_pad) * NEG_INF)[:, None, None, :]

    out = decoder_forward(
        decoder_input_ids, decoder_attention_mask,
        encoder_hidden_states, encoder_attention_mask,
        params, config,
    )
    out = jax.block_until_ready(out)

    assert out.shape == (B, L, config["d_model"]), out.shape
    assert bool(jnp.all(jnp.isfinite(out)))
    print("KERNEL_OK")
</pallas_src>

<mosaic_0001>
module attributes {stable_mosaic.version = 11 : i64} {
  func.func @_ln_kernel(%arg0: i32, %arg1: memref<16x128xbf16, #tpu.memory_space<vmem>>, %arg2: memref<1x128xf32, #tpu.memory_space<vmem>>, %arg3: memref<1x128xf32, #tpu.memory_space<vmem>>, %arg4: memref<16x128xbf16, #tpu.memory_space<vmem>>) attributes {dimension_semantics = [#tpu.dimension_semantics<parallel>], iteration_bounds = array<i64: 1>, scalar_prefetch = 0 : i64, scratch_operands = 0 : i64, tpu.core_type = #tpu.core_type<tc>, window_params = [{transform_indices = @transform_0, window_bounds = array<i64: 16, 128>}, {pipeline_mode = #tpu.pipeline_mode<synchronous>, transform_indices = @transform_1, window_bounds = array<i64: 1, 128>}, {pipeline_mode = #tpu.pipeline_mode<synchronous>, transform_indices = @transform_2, window_bounds = array<i64: 1, 128>}, {transform_indices = @transform_3, window_bounds = array<i64: 16, 128>}]} {
    %c0 = arith.constant 0 : index
    %c0_0 = arith.constant 0 : index
    %0 = vector.load %arg1[%c0, %c0_0] : memref<16x128xbf16, #tpu.memory_space<vmem>>, vector<16x128xbf16>
    %1 = arith.extf %0 : vector<16x128xbf16> to vector<16x128xf32>
    %cst = arith.constant dense<0.000000e+00> : vector<16xf32>
    %2 = vector.multi_reduction <add>, %1, %cst [1] : vector<16x128xf32> to vector<16xf32>
    %3 = vector.shape_cast %2 : vector<16xf32> to vector<16x1xf32>
    %cst_1 = arith.constant 1.280000e+02 : f32
    %4 = vector.broadcast %cst_1 : f32 to vector<16x1xf32>
    %5 = arith.divf %3, %4 : vector<16x1xf32>
    %6 = vector.broadcast %5 : vector<16x1xf32> to vector<16x128xf32>
    %7 = arith.subf %1, %6 : vector<16x128xf32>
    %8 = arith.mulf %7, %7 : vector<16x128xf32>
    %cst_2 = arith.constant dense<0.000000e+00> : vector<16xf32>
    %9 = vector.multi_reduction <add>, %8, %cst_2 [1] : vector<16x128xf32> to vector<16xf32>
    %10 = vector.shape_cast %9 : vector<16xf32> to vector<16x1xf32>
    %cst_3 = arith.constant 1.280000e+02 : f32
    %11 = vector.broadcast %cst_3 : f32 to vector<16x1xf32>
    %12 = arith.divf %10, %11 : vector<16x1xf32>
    %13 = vector.broadcast %5 : vector<16x1xf32> to vector<16x128xf32>
    %14 = arith.subf %1, %13 : vector<16x128xf32>
    %cst_4 = arith.constant 9.99999974E-6 : f32
    %15 = vector.broadcast %cst_4 : f32 to vector<16x1xf32>
    %16 = arith.addf %12, %15 : vector<16x1xf32>
    %17 = math.rsqrt %16 : vector<16x1xf32>
    %18 = vector.broadcast %17 : vector<16x1xf32> to vector<16x128xf32>
    %19 = arith.mulf %14, %18 : vector<16x128xf32>
    %c0_5 = arith.constant 0 : index
    %c0_6 = arith.constant 0 : index
    %20 = vector.load %arg2[%c0_5, %c0_6] : memref<1x128xf32, #tpu.memory_space<vmem>>, vector<1x128xf32>
    %21 = vector.broadcast %20 : vector<1x128xf32> to vector<16x128xf32>
    %22 = arith.mulf %19, %21 : vector<16x128xf32>
    %c0_7 = arith.constant 0 : index
    %c0_8 = arith.constant 0 : index
    %23 = vector.load %arg3[%c0_7, %c0_8] : memref<1x128xf32, #tpu.memory_space<vmem>>, vector<1x128xf32>
    %24 = vector.broadcast %23 : vector<1x128xf32> to vector<16x128xf32>
    %25 = arith.addf %22, %24 : vector<16x128xf32>
    %26 = arith.truncf %25 : vector<16x128xf32> to vector<16x128xbf16>
    %c0_9 = arith.constant 0 : index
    %c0_10 = arith.constant 0 : index
    %27 = vector.load %arg4[%c0_9, %c0_10] : memref<16x128xbf16, #tpu.memory_space<vmem>>, vector<16x128xbf16>
    tpu.vector_store %arg4[%c0_9, %c0_10], %26 {strides = array<i32>} : memref<16x128xbf16, #tpu.memory_space<vmem>>, vector<16x128xbf16>,
    return
  }
  func.func @transform_0(%arg0: i32) -> (i32, i32) {
    %c0_i32 = arith.constant 0 : i32
    %c0_i32_0 = arith.constant 0 : i32
    return %arg0, %c0_i32 : i32, i32
  }
  func.func @transform_1(%arg0: i32) -> (i32, i32) {
    %c0_i32 = arith.constant 0 : i32
    %c0_i32_0 = arith.constant 0 : i32
    %c0_i32_1 = arith.constant 0 : i32
    return %c0_i32, %c0_i32_0 : i32, i32
  }
  func.func @transform_2(%arg0: i32) -> (i32, i32) {
    %c0_i32 = arith.constant 0 : i32
    %c0_i32_0 = arith.constant 0 : i32
    %c0_i32_1 = arith.constant 0 : i32
    return %c0_i32, %c0_i32_0 : i32, i32
  }
  func.func @transform_3(%arg0: i32) -> (i32, i32) {
    %c0_i32 = arith.constant 0 : i32
    %c0_i32_0 = arith.constant 0 : i32
    return %arg0, %c0_i32 : i32, i32
  }
}

</mosaic_0001>

<llo_original>
// kernel: tpu_custom_call.1
$region0: #{tpu_custom_call.1}
  #allocation0 [shape = 'u32[]', space=smem, size = 0x4, offset = 0x4, fixed_abs, tag = 'smem constant byte address 0x4 - core index']
  #allocation1 [shape = 'u32[144,128]{1,0:T(1,128)}', space=vmem, size = 0x12000, scoped, tag = 'internal scratch']
  %s0 = inlined_call_operand.hbm [shape: bf16[16,128], index: 0, kind: input, shape index: {}]
  %s1 = inlined_call_operand.vmem [shape: f32[1,128], index: 1, kind: input, shape index: {}]
  %s2 = inlined_call_operand.vmem [shape: f32[1,128], index: 2, kind: input, shape index: {}]
  %s3 = inlined_call_operand.hbm [shape: bf16[16,128], index: 3, kind: output, shape index: {}]
  %s4 = sld [smem:[#allocation0]]
  $region26: #{tpu_custom_call.1} parent=0
    _
  %s6 = ssub.s32 1, %s4
  %s7 = scalar_select 0, %s6, %s4
  $region1: #{tpu_custom_call.1} parent=0
    #allocation2 [shape = 'u8[4096]{0}', space=vmem, size = 0x1000, scoped, tag = 'input window, operand 0, single buffered']
    #allocation3 [shape = 's32[1]{0}', space=sflag, size = 0x4, scoped, tag = 'scoped memory for tpu_custom_call.1']
    #allocation4 [shape = 's32[1]{0}', space=sflag, size = 0x4, scoped, tag = 'scoped memory for tpu_custom_call.1']
    #allocation5 [shape = 'u8[4096]{0}', space=vmem, size = 0x1000, scoped, tag = 'output window, operand 0, single buffered']
    %8 = vsyncpa [#allocation3], 0
    %9 = vsyncpa [#allocation4], 0
    // Predicated region
    $region2: #{tpu_custom_call.1} parent=1 // pred_check
      _
    $region3: #{tpu_custom_call.1} parent=1 // pred_check_branch
      %11 = sbr.rel (0) target = $region5
    $region4: #{tpu_custom_call.1} parent=1 // pred_region
      %s13 = ssub.s32 128, 128
      %14 = vsyncadd [#allocation3], %s13
      %s15 = sshll.u32 [#allocation2], 4
      %s16 = int_to_ptr.vmem [resolvable:$true] %s15
      %21 = dma.hbm_to_vmem [thread:$0]  %s0, 128, %s16, [#allocation3], 64, 64, 4
    $region5: #{tpu_custom_call.1} parent=1 // pred_fallthru
      _
    // Predicated region
    $region6: #{tpu_custom_call.1} parent=1 // pred_check
      _
    $region7: #{tpu_custom_call.1} parent=1 // pred_check_branch
      %23 = sbr.rel (0) target = $region9
    $region8: #{tpu_custom_call.1} parent=1 // pred_region
      _
    $region9: #{tpu_custom_call.1} parent=1 // pred_fallthru
      _
    // Predicated region
    $region10: #{tpu_custom_call.1} parent=1 // pred_check
      _
    $region11: #{tpu_custom_call.1} parent=1 // pred_check_branch
      %25 = sbr.rel (0) target = $region13
    $region12: #{tpu_custom_call.1} parent=1 // pred_region
      _
    $region13: #{tpu_custom_call.1} parent=1 // pred_fallthru
      _
    // Predicated region
    $region14: #{tpu_custom_call.1} parent=1 // pred_check
      _
    $region15: #{tpu_custom_call.1} parent=1 // pred_check_branch
      %27 = sbr.rel (0) target = $region17
    $region16: #{tpu_custom_call.1} parent=1 // pred_region
      %28 = dma.done [#allocation3], 128
    $region17: #{tpu_custom_call.1} parent=1 // pred_fallthru
      _
    %v29 = vld [vmem:[#allocation2] sm:$0xf]
    %v30 = vld [vmem:[#allocation2 + $0x4] sm:$0xf]
    %v31 = vunpack.c.l.bf16 %v29
    %v32 = vunpack.c.l.bf16 %v30
    %33 = vadd.xlane.f32.xlu0 %v31
    %v34 = vpop.xlane.xlu0 %33
    %35 = vadd.xlane.f32.xlu0 %v32
    %v36 = vpop.xlane.xlu0 %35
    %v37 = vrcp.pop 128.0
    %v38 = vmul.f32 %v34, %v37
    %v39 = vmul.f32 %v36, %v37
    %v40 = vsub.f32 %v31, %v38
    %v41 = vsub.f32 %v32, %v39
    %v42 = vmul.f32 %v40, %v40
    %v43 = vmul.f32 %v41, %v41
    %44 = vadd.xlane.f32.xlu0 %v42
    %v45 = vpop.xlane.xlu0 %44
    %46 = vadd.xlane.f32.xlu0 %v43
    %v47 = vpop.xlane.xlu0 %46
    %v48 = vmul.f32 %v45, %v37
    %v49 = vmul.f32 %v47, %v37
    %v50 = vadd.f32 %v48, 1e-05
    %v51 = vadd.f32 %v49, 1e-05
    %v52 = vrsqrt.pop %v50
    %v53 = vrsqrt.pop %v51
    %v54 = vmul.f32 %v40, %v52
    %v55 = vmul.f32 %v41, %v53
    %v56 = vld [vmem:[%s1] sm:$0x1]
    %v58 = vlaneseq
    %v59 = vshrl.u32 %v58, 7
    %v60 = vsub.s32 0, %v59
    %v61 = vrot.slane %v56, %v60
    %v63 = vmul.f32 %v54, %v61
    %v64 = vmul.f32 %v55, %v61
    %v65 = vld [vmem:[%s2] sm:$0x1]
    %v67 = vlaneseq
    %v68 = vshrl.u32 %v67, 7
    %v69 = vsub.s32 0, %v68
    %v70 = vrot.slane %v65, %v69
    %v72 = vadd.f32 %v63, %v70
    %v73 = vadd.f32 %v64, %v70
    %v74 = vpack.c.bf16 %v73, %v72
    %v76 = vunpack.c.l.b16 %v74
    %v77 = vunpack.c.h.b16 %v74
    %v78 = vpack.c.b16 %v76, %v76
    %v79 = vpack.c.b16 %v77, %v77
    %82 = vst [vmem:[#allocation5] sm:$0xf] %v78
    %83 = vst [vmem:[#allocation5 + $0x4] sm:$0xf] %v79
    // Predicated region
    $region18: #{tpu_custom_call.1} parent=1 // pred_check
      _
    $region19: #{tpu_custom_call.1} parent=1 // pred_check_branch
      %85 = sbr.rel (0) target = $region21
    $region20: #{tpu_custom_call.1} parent=1 // pred_region
      %s87 = ssub.s32 128, 128
      %88 = vsyncadd [#allocation4], %s87
      %s89 = sshll.u32 [#allocation5], 4
      %s90 = int_to_ptr.vmem [resolvable:$true] %s89
      %95 = dma.vmem_to_hbm [thread:$0]  %s90, 128, %s3, [#allocation4], 64, 64, 4
    $region21: #{tpu_custom_call.1} parent=1 // pred_fallthru
      _
    // Predicated region
    $region22: #{tpu_custom_call.1} parent=1 // pred_check
      _
    $region23: #{tpu_custom_call.1} parent=1 // pred_check_branch
      %97 = sbr.rel (0) target = $region25
    $region24: #{tpu_custom_call.1} parent=1 // pred_region
      %98 = dma.done [#allocation4], 128
    $region25: #{tpu_custom_call.1} parent=1 // pred_fallthru
      _
    %99 = vsyncpa [#allocation3], 1
    %100 = vsyncpa [#allocation4], 1

</llo_original>
